<compile_context>
chip_gen: v7x
topology: tpu7x:2x2x1
jax: 0.10.0
libtpu: 0.0.40
codegen_flags: <defaults>
</compile_context>

<pallas_src>
import jax
import jax.numpy as jnp
from jax.experimental import pallas as pl
from jax.experimental.pallas import tpu as pltpu


def _lsd_kernel(pred_ref, true_ref, seg_ref, out_ref):
    """One grid step over a (row_tile, g*W) lane-dense slab.

    seg_ref is a constant (g*W, g) matrix whose column s holds 1/W over the
    lanes of segment s, so `d2 @ seg` gives the per-original-row mean over W.
    The step's scalar partial sum is written to row 0 of its own (8, g)
    output block (rows 1..7 zero); the wrapper sums all partials.
    """
    diff = true_ref[...].astype(jnp.float32) - pred_ref[...].astype(jnp.float32)
    msq = jnp.dot(
        diff * diff,
        seg_ref[...],
        precision=jax.lax.Precision.HIGHEST,  # f32-exact segmented mean on MXU
        preferred_element_type=jnp.float32,
    )                                         # (row_tile, g)
    msq = jnp.maximum(msq, 0.0)               # guard sqrt against rounding
    partial = jnp.sum(jnp.sqrt(msq), axis=0, keepdims=True)   # (1, g)
    row_idx = jax.lax.broadcasted_iota(jnp.int32, out_ref.shape, 0)
    out_ref[...] = jnp.where(row_idx == 0, partial, jnp.float32(0.0))


def lsd_loss(y_pred, y_true, *, target_block_bytes=4 * 1024 * 1024):
    """Pallas implementation of LSDLoss.forward for 4D (B, C, H, W) inputs."""
    assert y_pred.shape == y_true.shape and y_pred.ndim == 4
    B, C, H, W = y_pred.shape
    rows = B * C * H
    if y_true.dtype != y_pred.dtype:
        y_true = y_true.astype(y_pred.dtype)
    itemsize = jnp.dtype(y_pred.dtype).itemsize

    # Lane-dense grouping: pack g length-W rows along the lane axis.
    g = max(1, 128 // W) if W < 128 else 1
    lane_w = g * W

    # Row tile (in grouped rows): ~target_block_bytes per input block,
    # multiple of 16 (covers f32 and bf16 sublane tiling), at least 16.
    grouped_rows = pl.cdiv(rows, g)
    cap = max(16, (target_block_bytes // (lane_w * itemsize)) // 16 * 16)
    row_tile = min(cap, ((grouped_rows + 15) // 16) * 16)
    # Prefer an evenly dividing tile (avoids a padding copy) if one exists
    # that is at least half the cap.
    if grouped_rows % row_tile != 0 and grouped_rows % 16 == 0:
        for t in range(row_tile, max(16, row_tile // 2) - 1, -16):
            if grouped_rows % t == 0:
                row_tile = t
                break
    padded_grouped_rows = pl.cdiv(grouped_rows, row_tile) * row_tile
    num_tiles = padded_grouped_rows // row_tile
    padded_rows = padded_grouped_rows * g

    pred2 = y_pred.reshape(rows, W)
    true2 = y_true.reshape(rows, W)
    if padded_rows != rows:
        # Zero-padded rows contribute sqrt(mean(0)) == 0 to the sum.
        pad = ((0, padded_rows - rows), (0, 0))
        pred2 = jnp.pad(pred2, pad)
        true2 = jnp.pad(true2, pad)
    # Contiguous reshape: free (metadata-only), packs g rows per lane row.
    pred2 = pred2.reshape(padded_grouped_rows, lane_w)
    true2 = true2.reshape(padded_grouped_rows, lane_w)

    # Constant (lane_w, g) segment-mean matrix: column s is 1/W over segment s.
    seg_id = jnp.arange(lane_w, dtype=jnp.int32) // W
    seg = (seg_id[:, None] == jnp.arange(g, dtype=jnp.int32)[None, :]).astype(
        jnp.float32) * jnp.float32(1.0 / W)

    cost = pl.CostEstimate(
        flops=3 * rows * W,
        transcendentals=rows,
        bytes_accessed=2 * padded_rows * W * itemsize
        + num_tiles * 8 * g * 4
        + lane_w * g * 4,
    )

    partials = pl.pallas_call(
        _lsd_kernel,
        out_shape=jax.ShapeDtypeStruct((num_tiles * 8, g), jnp.float32),
        grid_spec=pltpu.PrefetchScalarGridSpec(
            num_scalar_prefetch=0,
            grid=(num_tiles,),
            in_specs=[
                pl.BlockSpec((row_tile, lane_w), lambda i: (i, 0)),
                pl.BlockSpec((row_tile, lane_w), lambda i: (i, 0)),
                pl.BlockSpec((lane_w, g), lambda i: (0, 0)),  # resident constant
            ],
            out_specs=pl.BlockSpec((8, g), lambda i: (i, 0)),
        ),
        compiler_params=pltpu.CompilerParams(
            # Each step writes its own partial block -> fully parallel grid
            # (v7x megacore shards it across the 2 TensorCores).
            dimension_semantics=("parallel",),
            # 2 inputs x 2 pipeline buffers x ~4 MiB blocks + slack; fits every
            # generation (v5e default scoped 16 MiB is too small, v7x has 64).
            vmem_limit_bytes=40 * 1024 * 1024,
        ),
        cost_estimate=cost,
    )(pred2, true2, seg)

    return jnp.sum(partials) / jnp.float32(rows)


def lsd_loss_ref(y_pred, y_true):
    """Pure-JAX reference mirroring the torch code exactly."""
    squared_diff = jnp.mean((y_true - y_pred) ** 2, axis=3)
    lsd = jnp.mean(jnp.sqrt(squared_diff), axis=2)
    return jnp.mean(lsd)


if __name__ == "__main__":
    key = jax.random.PRNGKey(0)
    k1, k2 = jax.random.split(key)
    B, C, H, W = 2, 4, 16, 16
    y_pred = jax.random.normal(k1, (B, C, H, W), dtype=jnp.float32)
    y_true = jax.random.normal(k2, (B, C, H, W), dtype=jnp.float32)

    out = jax.block_until_ready(lsd_loss(y_pred, y_true))
    ref = jax.block_until_ready(lsd_loss_ref(y_pred, y_true))

    assert jnp.allclose(out, ref, rtol=1e-5, atol=1e-5), (out, ref)
    print("KERNEL_OK")
</pallas_src>

<mosaic_0001>
module attributes {stable_mosaic.version = 11 : i64} {
  func.func @_lsd_kernel(%arg0: i32, %arg1: memref<16x128xf32, #tpu.memory_space<vmem>>, %arg2: memref<16x128xf32, #tpu.memory_space<vmem>>, %arg3: memref<128x8xf32, #tpu.memory_space<vmem>>, %arg4: memref<8x8xf32, #tpu.memory_space<vmem>>) attributes {dimension_semantics = [#tpu.dimension_semantics<parallel>], iteration_bounds = array<i64: 1>, scalar_prefetch = 0 : i64, scratch_operands = 0 : i64, tpu.core_type = #tpu.core_type<tc>, window_params = [{transform_indices = @transform_0, window_bounds = array<i64: 16, 128>}, {transform_indices = @transform_1, window_bounds = array<i64: 16, 128>}, {pipeline_mode = #tpu.pipeline_mode<synchronous>, transform_indices = @transform_2, window_bounds = array<i64: 128, 8>}, {transform_indices = @transform_3, window_bounds = array<i64: 8, 8>}]} {
    %c0 = arith.constant 0 : index
    %c0_0 = arith.constant 0 : index
    %0 = vector.load %arg2[%c0, %c0_0] : memref<16x128xf32, #tpu.memory_space<vmem>>, vector<16x128xf32>
    %c0_1 = arith.constant 0 : index
    %c0_2 = arith.constant 0 : index
    %1 = vector.load %arg1[%c0_1, %c0_2] : memref<16x128xf32, #tpu.memory_space<vmem>>, vector<16x128xf32>
    %2 = arith.subf %0, %1 : vector<16x128xf32>
    %3 = arith.mulf %2, %2 : vector<16x128xf32>
    %c0_3 = arith.constant 0 : index
    %c0_4 = arith.constant 0 : index
    %4 = vector.load %arg3[%c0_3, %c0_4] : memref<128x8xf32, #tpu.memory_space<vmem>>, vector<128x8xf32>
    %cst = arith.constant dense<0.000000e+00> : vector<16x8xf32>
    %5 = tpu.matmul %3, %4, %cst {dimension_numbers = #tpu.dot_dimension_numbers<[1], [0], [0], [1], [0, 0, 1, 1], [], []>, precision = #tpu.contract_precision<fp32>} : vector<16x128xf32>, vector<128x8xf32>, vector<16x8xf32> -> vector<16x8xf32>
    %cst_5 = arith.constant 0.000000e+00 : f32
    %6 = vector.broadcast %cst_5 : f32 to vector<16x8xf32>
    %7 = arith.maximumf %5, %6 : vector<16x8xf32>
    %8 = math.sqrt %7 : vector<16x8xf32>
    %cst_6 = arith.constant dense<0.000000e+00> : vector<8xf32>
    %9 = vector.multi_reduction <add>, %8, %cst_6 [0] : vector<16x8xf32> to vector<8xf32>
    %10 = vector.shape_cast %9 : vector<8xf32> to vector<1x8xf32>
    %11 = tpu.iota {dimensions = array<i32: 0>} : vector<8x8xi32>
    %c0_i32 = arith.constant 0 : i32
    %12 = vector.broadcast %c0_i32 : i32 to vector<8x8xi32>
    %13 = arith.cmpi eq, %11, %12 : vector<8x8xi32>
    %cst_7 = arith.constant 0.000000e+00 : f32
    %14 = vector.shape_cast %10 : vector<1x8xf32> to vector<1x8xf32>
    %15 = vector.broadcast %14 : vector<1x8xf32> to vector<8x8xf32>
    %16 = vector.broadcast %cst_7 : f32 to vector<8x8xf32>
    %17 = arith.select %13, %15, %16 : vector<8x8xi1>, vector<8x8xf32>
    %c0_8 = arith.constant 0 : index
    %c0_9 = arith.constant 0 : index
    %18 = vector.load %arg4[%c0_8, %c0_9] : memref<8x8xf32, #tpu.memory_space<vmem>>, vector<8x8xf32>
    tpu.vector_store %arg4[%c0_8, %c0_9], %17 {strides = array<i32>} : memref<8x8xf32, #tpu.memory_space<vmem>>, vector<8x8xf32>,
    return
  }
  func.func @transform_0(%arg0: i32) -> (i32, i32) {
    %c0_i32 = arith.constant 0 : i32
    %c0_i32_0 = arith.constant 0 : i32
    return %arg0, %c0_i32 : i32, i32
  }
  func.func @transform_1(%arg0: i32) -> (i32, i32) {
    %c0_i32 = arith.constant 0 : i32
    %c0_i32_0 = arith.constant 0 : i32
    return %arg0, %c0_i32 : i32, i32
  }
  func.func @transform_2(%arg0: i32) -> (i32, i32) {
    %c0_i32 = arith.constant 0 : i32
    %c0_i32_0 = arith.constant 0 : i32
    %c0_i32_1 = arith.constant 0 : i32
    return %c0_i32, %c0_i32_0 : i32, i32
  }
  func.func @transform_3(%arg0: i32) -> (i32, i32) {
    %c0_i32 = arith.constant 0 : i32
    %c0_i32_0 = arith.constant 0 : i32
    return %arg0, %c0_i32 : i32, i32
  }
}

</mosaic_0001>

<llo_original>
// kernel: tpu_custom_call.1
$region0: #{tpu_custom_call.1}
  #allocation0 [shape = 'u32[]', space=smem, size = 0x4, offset = 0x4, fixed_abs, tag = 'smem constant byte address 0x4 - core index']
  #allocation1 [shape = 'u32[144,128]{1,0:T(1,128)}', space=vmem, size = 0x12000, scoped, tag = 'internal scratch']
  %s0 = inlined_call_operand.vmem [shape: f32[16,128], index: 0, kind: input, shape index: {}]
  %s1 = inlined_call_operand.vmem [shape: f32[16,128], index: 1, kind: input, shape index: {}]
  %s2 = inlined_call_operand.vmem [shape: f32[128,8], index: 2, kind: input, shape index: {}]
  %s3 = inlined_call_operand.hbm [shape: f32[8,8], index: 3, kind: output, shape index: {}]
  %s4 = sld [smem:[#allocation0]]
  $region22: #{tpu_custom_call.1} parent=0
    _
  %s6 = ssub.s32 1, %s4
  %s7 = scalar_select 0, %s6, %s4
  $region1: #{tpu_custom_call.1} parent=0
    #allocation2 [shape = 'u8[4096]{0}', space=vmem, size = 0x1000, scoped, tag = 'output window, operand 0, single buffered']
    #allocation3 [shape = 's32[1]{0}', space=sflag, size = 0x4, scoped, tag = 'scoped memory for tpu_custom_call.1']
    %8 = vsyncpa [#allocation3], 0
    // Predicated region
    $region2: #{tpu_custom_call.1} parent=1 // pred_check
      _
    $region3: #{tpu_custom_call.1} parent=1 // pred_check_branch
      %10 = sbr.rel (0) target = $region5
    $region4: #{tpu_custom_call.1} parent=1 // pred_region
      _
    $region5: #{tpu_custom_call.1} parent=1 // pred_fallthru
      _
    // Predicated region
    $region6: #{tpu_custom_call.1} parent=1 // pred_check
      _
    $region7: #{tpu_custom_call.1} parent=1 // pred_check_branch
      %12 = sbr.rel (0) target = $region9
    $region8: #{tpu_custom_call.1} parent=1 // pred_region
      _
    $region9: #{tpu_custom_call.1} parent=1 // pred_fallthru
      _
    // Predicated region
    $region10: #{tpu_custom_call.1} parent=1 // pred_check
      _
    $region11: #{tpu_custom_call.1} parent=1 // pred_check_branch
      %14 = sbr.rel (0) target = $region13
    $region12: #{tpu_custom_call.1} parent=1 // pred_region
      _
    $region13: #{tpu_custom_call.1} parent=1 // pred_fallthru
      _
    %v15 = vld [vmem:[%s1] sm:$0xff]
    %v16 = vld [vmem:[%s1 + $0x8] sm:$0xff]
    %v17 = vld [vmem:[%s0] sm:$0xff]
    %v18 = vld [vmem:[%s0 + $0x8] sm:$0xff]
    %v19 = vsub.f32 %v15, %v17
    %v20 = vsub.f32 %v16, %v18
    %v21 = vmul.f32 %v19, %v19
    %v22 = vmul.f32 %v20, %v20
    %v23 = vld [vmem:[%s2] sm:$0xff]
    %v24 = vld [vmem:[%s2 + $0x8] sm:$0xff]
    %v25 = vld [vmem:[%s2 + $0x10] sm:$0xff]
    %v26 = vld [vmem:[%s2 + $0x18] sm:$0xff]
    %v27 = vld [vmem:[%s2 + $0x20] sm:$0xff]
    %v28 = vld [vmem:[%s2 + $0x28] sm:$0xff]
    %v29 = vld [vmem:[%s2 + $0x30] sm:$0xff]
    %v30 = vld [vmem:[%s2 + $0x38] sm:$0xff]
    %v31 = vld [vmem:[%s2 + $0x40] sm:$0xff]
    %v32 = vld [vmem:[%s2 + $0x48] sm:$0xff]
    %v33 = vld [vmem:[%s2 + $0x50] sm:$0xff]
    %v34 = vld [vmem:[%s2 + $0x58] sm:$0xff]
    %v35 = vld [vmem:[%s2 + $0x60] sm:$0xff]
    %v36 = vld [vmem:[%s2 + $0x68] sm:$0xff]
    %v37 = vld [vmem:[%s2 + $0x70] sm:$0xff]
    %v38 = vld [vmem:[%s2 + $0x78] sm:$0xff]
    %39 = vmatprep.subr.mxu0 0.0
    %v40 = vand.u32 %v23, 4294901760
    %41 = vmatpush1.msra.mxu0 %v40
    %42 = vmatprep.subr.mxu0 0.0
    %v43 = vand.u32 %v24, 4294901760
    %44 = vmatpush1.msra.mxu0 %v43
    %45 = vmatprep.subr.mxu0 0.0
    %v46 = vand.u32 %v25, 4294901760
    %47 = vmatpush1.msra.mxu0 %v46
    %48 = vmatprep.subr.mxu0 0.0
    %v49 = vand.u32 %v26, 4294901760
    %50 = vmatpush1.msra.mxu0 %v49
    %51 = vmatprep.subr.mxu0 0.0
    %v52 = vand.u32 %v27, 4294901760
    %53 = vmatpush1.msra.mxu0 %v52
    %54 = vmatprep.subr.mxu0 0.0
    %v55 = vand.u32 %v28, 4294901760
    %56 = vmatpush1.msra.mxu0 %v55
    %57 = vmatprep.subr.mxu0 0.0
    %v58 = vand.u32 %v29, 4294901760
    %59 = vmatpush1.msra.mxu0 %v58
    %60 = vmatprep.subr.mxu0 0.0
    %v61 = vand.u32 %v30, 4294901760
    %62 = vmatpush1.msra.mxu0 %v61
    %63 = vmatprep.subr.mxu0 0.0
    %v64 = vand.u32 %v31, 4294901760
    %65 = vmatpush1.msra.mxu0 %v64
    %66 = vmatprep.subr.mxu0 0.0
    %v67 = vand.u32 %v32, 4294901760
    %68 = vmatpush1.msra.mxu0 %v67
    %69 = vmatprep.subr.mxu0 0.0
    %v70 = vand.u32 %v33, 4294901760
    %71 = vmatpush1.msra.mxu0 %v70
    %72 = vmatprep.subr.mxu0 0.0
    %v73 = vand.u32 %v34, 4294901760
    %74 = vmatpush1.msra.mxu0 %v73
    %75 = vmatprep.subr.mxu0 0.0
    %v76 = vand.u32 %v35, 4294901760
    %77 = vmatpush1.msra.mxu0 %v76
    %78 = vmatprep.subr.mxu0 0.0
    %v79 = vand.u32 %v36, 4294901760
    %80 = vmatpush1.msra.mxu0 %v79
    %81 = vmatprep.subr.mxu0 0.0
    %v82 = vand.u32 %v37, 4294901760
    %83 = vmatpush1.msra.mxu0 %v82
    %84 = vmatprep.subr.mxu0 0.0
    %v85 = vand.u32 %v38, 4294901760
    %86 = vmatpush1.msra.mxu0 %v85
    %87 = vmatprep.subr.mxu0 0.0
    %88 = vmatpush1.msra.mxu0 0.0
    %89 = vmatprep.subr.mxu0 0.0
    %90 = vmatpush1.msra.mxu0 0.0
    %91 = vmatprep.subr.mxu0 0.0
    %92 = vmatpush1.msra.mxu0 0.0
    %93 = vmatprep.subr.mxu0 0.0
    %94 = vmatpush1.msra.mxu0 0.0
    %95 = vmatprep.subr.mxu0 0.0
    %96 = vmatpush1.msra.mxu0 0.0
    %97 = vmatprep.subr.mxu0 0.0
    %98 = vmatpush1.msra.mxu0 0.0
    %99 = vmatprep.subr.mxu0 0.0
    %100 = vmatpush1.msra.mxu0 0.0
    %101 = vmatprep.subr.mxu0 0.0
    %102 = vmatpush1.msra.mxu0 0.0
    %103 = vmatprep.subr.mxu0 0.0
    %104 = vmatpush1.msra.mxu0 0.0
    %105 = vmatprep.subr.mxu0 0.0
    %106 = vmatpush1.msra.mxu0 0.0
    %107 = vmatprep.subr.mxu0 0.0
    %108 = vmatpush1.msra.mxu0 0.0
    %109 = vmatprep.subr.mxu0 0.0
    %110 = vmatpush1.msra.mxu0 0.0
    %111 = vmatprep.subr.mxu0 0.0
    %112 = vmatpush1.msra.mxu0 0.0
    %113 = vmatprep.subr.mxu0 0.0
    %114 = vmatpush1.msra.mxu0 0.0
    %115 = vmatprep.subr.mxu0 0.0
    %116 = vmatpush1.msra.mxu0 0.0
    %117 = vmatprep.subr.mxu0 0.0
    %118 = vmatpush1.msra.mxu0 0.0
    %119 = vmatprep.mubr.f32.mxu0 0.0
    %v120 = vand.u32 %v21, 4294901760
    %v121 = vsub.f32 %v21, %v120
    %v122 = vand.u32 %v121, 4294901760
    %v123 = vsub.f32 %v121, %v122
    %v124 = vand.u32 %v123, 4294901760
    %125 = vmatmul.mubr.f32.gmra.mrb[0].mxu0 %v124
    %v126 = vpop.f32.mrb[0].mxu0
    %v127 = vadd.f32 0.0, %v126
    %v128 = vpop.f32.mrb[0].mxu0
    %129 = vmatprep.mubr.f32.mxu0 0.0
    %v130 = vand.u32 %v22, 4294901760
    %v131 = vsub.f32 %v22, %v130
    %v132 = vand.u32 %v131, 4294901760
    %v133 = vsub.f32 %v131, %v132
    %v134 = vand.u32 %v133, 4294901760
    %135 = vmatmul.mubr.f32.gmra.mrb[0].mxu0 %v134
    %v136 = vpop.f32.mrb[0].mxu0
    %v137 = vadd.f32 0.0, %v136
    %v138 = vpop.f32.mrb[0].mxu0
    %139 = vdwg.mxu0
    %140 = vmatprep.subr.mxu0 0.0
    %v141 = vand.u32 %v23, 4294901760
    %v142 = vsub.f32 %v23, %v141
    %v143 = vand.u32 %v142, 4294901760
    %v144 = vsub.f32 %v142, %v143
    %v145 = vand.u32 %v144, 4294901760
    %146 = vmatpush1.msra.mxu0 %v145
    %147 = vmatprep.subr.mxu0 0.0
    %v148 = vand.u32 %v24, 4294901760
    %v149 = vsub.f32 %v24, %v148
    %v150 = vand.u32 %v149, 4294901760
    %v151 = vsub.f32 %v149, %v150
    %v152 = vand.u32 %v151, 4294901760
    %153 = vmatpush1.msra.mxu0 %v152
    %154 = vmatprep.subr.mxu0 0.0
    %v155 = vand.u32 %v25, 4294901760
    %v156 = vsub.f32 %v25, %v155
    %v157 = vand.u32 %v156, 4294901760
    %v158 = vsub.f32 %v156, %v157
    %v159 = vand.u32 %v158, 4294901760
    %160 = vmatpush1.msra.mxu0 %v159
    %161 = vmatprep.subr.mxu0 0.0
    %v162 = vand.u32 %v26, 4294901760
    %v163 = vsub.f32 %v26, %v162
    %v164 = vand.u32 %v163, 4294901760
    %v165 = vsub.f32 %v163, %v164
    %v166 = vand.u32 %v165, 4294901760
    %167 = vmatpush1.msra.mxu0 %v166
    %168 = vmatprep.subr.mxu0 0.0
    %v169 = vand.u32 %v27, 4294901760
    %v170 = vsub.f32 %v27, %v169
    %v171 = vand.u32 %v170, 4294901760
    %v172 = vsub.f32 %v170, %v171
    %v173 = vand.u32 %v172, 4294901760
    %174 = vmatpush1.msra.mxu0 %v173
    %175 = vmatprep.subr.mxu0 0.0
    %v176 = vand.u32 %v28, 4294901760
    %v177 = vsub.f32 %v28, %v176
    %v178 = vand.u32 %v177, 4294901760
    %v179 = vsub.f32 %v177, %v178
    %v180 = vand.u32 %v179, 4294901760
    %181 = vmatpush1.msra.mxu0 %v180
    %182 = vmatprep.subr.mxu0 0.0
    %v183 = vand.u32 %v29, 4294901760
    %v184 = vsub.f32 %v29, %v183
    %v185 = vand.u32 %v184, 4294901760
    %v186 = vsub.f32 %v184, %v185
    %v187 = vand.u32 %v186, 4294901760
    %188 = vmatpush1.msra.mxu0 %v187
    %189 = vmatprep.subr.mxu0 0.0
    %v190 = vand.u32 %v30, 4294901760
    %v191 = vsub.f32 %v30, %v190
    %v192 = vand.u32 %v191, 4294901760
    %v193 = vsub.f32 %v191, %v192
    %v194 = vand.u32 %v193, 4294901760
    %195 = vmatpush1.msra.mxu0 %v194
    %196 = vmatprep.subr.mxu0 0.0
    %v197 = vand.u32 %v31, 4294901760
    %v198 = vsub.f32 %v31, %v197
    %v199 = vand.u32 %v198, 4294901760
    %v200 = vsub.f32 %v198, %v199
    %v201 = vand.u32 %v200, 4294901760
    %202 = vmatpush1.msra.mxu0 %v201
    %203 = vmatprep.subr.mxu0 0.0
    %v204 = vand.u32 %v32, 4294901760
    %v205 = vsub.f32 %v32, %v204
    %v206 = vand.u32 %v205, 4294901760
    %v207 = vsub.f32 %v205, %v206
    %v208 = vand.u32 %v207, 4294901760
    %209 = vmatpush1.msra.mxu0 %v208
    %210 = vmatprep.subr.mxu0 0.0
    %v211 = vand.u32 %v33, 4294901760
    %v212 = vsub.f32 %v33, %v211
    %v213 = vand.u32 %v212, 4294901760
    %v214 = vsub.f32 %v212, %v213
    %v215 = vand.u32 %v214, 4294901760
    %216 = vmatpush1.msra.mxu0 %v215
    %217 = vmatprep.subr.mxu0 0.0
    %v218 = vand.u32 %v34, 4294901760
    %v219 = vsub.f32 %v34, %v218
    %v220 = vand.u32 %v219, 4294901760
    %v221 = vsub.f32 %v219, %v220
    %v222 = vand.u32 %v221, 4294901760
    %223 = vmatpush1.msra.mxu0 %v222
    %224 = vmatprep.subr.mxu0 0.0
    %v225 = vand.u32 %v35, 4294901760
    %v226 = vsub.f32 %v35, %v225
    %v227 = vand.u32 %v226, 4294901760
    %v228 = vsub.f32 %v226, %v227
    %v229 = vand.u32 %v228, 4294901760
    %230 = vmatpush1.msra.mxu0 %v229
    %231 = vmatprep.subr.mxu0 0.0
    %v232 = vand.u32 %v36, 4294901760
    %v233 = vsub.f32 %v36, %v232
    %v234 = vand.u32 %v233, 4294901760
    %v235 = vsub.f32 %v233, %v234
    %v236 = vand.u32 %v235, 4294901760
    %237 = vmatpush1.msra.mxu0 %v236
    %238 = vmatprep.subr.mxu0 0.0
    %v239 = vand.u32 %v37, 4294901760
    %v240 = vsub.f32 %v37, %v239
    %v241 = vand.u32 %v240, 4294901760
    %v242 = vsub.f32 %v240, %v241
    %v243 = vand.u32 %v242, 4294901760
    %244 = vmatpush1.msra.mxu0 %v243
    %245 = vmatprep.subr.mxu0 0.0
    %v246 = vand.u32 %v38, 4294901760
    %v247 = vsub.f32 %v38, %v246
    %v248 = vand.u32 %v247, 4294901760
    %v249 = vsub.f32 %v247, %v248
    %v250 = vand.u32 %v249, 4294901760
    %251 = vmatpush1.msra.mxu0 %v250
    %252 = vmatprep.subr.mxu0 0.0
    %253 = vmatpush1.msra.mxu0 0.0
    %254 = vmatprep.subr.mxu0 0.0
    %255 = vmatpush1.msra.mxu0 0.0
    %256 = vmatprep.subr.mxu0 0.0
    %257 = vmatpush1.msra.mxu0 0.0
    %258 = vmatprep.subr.mxu0 0.0
    %259 = vmatpush1.msra.mxu0 0.0
    %260 = vmatprep.subr.mxu0 0.0
    %261 = vmatpush1.msra.mxu0 0.0
    %262 = vmatprep.subr.mxu0 0.0
    %263 = vmatpush1.msra.mxu0 0.0
    %264 = vmatprep.subr.mxu0 0.0
    %265 = vmatpush1.msra.mxu0 0.0
    %266 = vmatprep.subr.mxu0 0.0
    %267 = vmatpush1.msra.mxu0 0.0
    %268 = vmatprep.subr.mxu0 0.0
    %269 = vmatpush1.msra.mxu0 0.0
    %270 = vmatprep.subr.mxu0 0.0
    %271 = vmatpush1.msra.mxu0 0.0
    %272 = vmatprep.subr.mxu0 0.0
    %273 = vmatpush1.msra.mxu0 0.0
    %274 = vmatprep.subr.mxu0 0.0
    %275 = vmatpush1.msra.mxu0 0.0
    %276 = vmatprep.subr.mxu0 0.0
    %277 = vmatpush1.msra.mxu0 0.0
    %278 = vmatprep.subr.mxu0 0.0
    %279 = vmatpush1.msra.mxu0 0.0
    %280 = vmatprep.subr.mxu0 0.0
    %281 = vmatpush1.msra.mxu0 0.0
    %282 = vmatprep.subr.mxu0 0.0
    %283 = vmatpush1.msra.mxu0 0.0
    %284 = vmatprep.mubr.f32.mxu0 0.0
    %v285 = vand.u32 %v21, 4294901760
    %286 = vmatmul.mubr.f32.gmra.mrb[0].mxu0 %v285
    %v287 = vpop.f32.mrb[0].mxu0
    %v288 = vadd.f32 %v127, %v287
    %v289 = vpop.f32.mrb[0].mxu0
    %290 = vmatprep.mubr.f32.mxu0 0.0
    %v291 = vand.u32 %v22, 4294901760
    %292 = vmatmul.mubr.f32.gmra.mrb[0].mxu0 %v291
    %v293 = vpop.f32.mrb[0].mxu0
    %v294 = vadd.f32 %v137, %v293
    %v295 = vpop.f32.mrb[0].mxu0
    %296 = vdwg.mxu0
    %297 = vmatprep.subr.mxu0 0.0
    %v298 = vand.u32 %v23, 4294901760
    %v299 = vsub.f32 %v23, %v298
    %300 = vmatpush1.msra.mxu0 %v299
    %301 = vmatprep.subr.mxu0 0.0
    %v302 = vand.u32 %v24, 4294901760
    %v303 = vsub.f32 %v24, %v302
    %304 = vmatpush1.msra.mxu0 %v303
    %305 = vmatprep.subr.mxu0 0.0
    %v306 = vand.u32 %v25, 4294901760
    %v307 = vsub.f32 %v25, %v306
    %308 = vmatpush1.msra.mxu0 %v307
    %309 = vmatprep.subr.mxu0 0.0
    %v310 = vand.u32 %v26, 4294901760
    %v311 = vsub.f32 %v26, %v310
    %312 = vmatpush1.msra.mxu0 %v311
    %313 = vmatprep.subr.mxu0 0.0
    %v314 = vand.u32 %v27, 4294901760
    %v315 = vsub.f32 %v27, %v314
    %316 = vmatpush1.msra.mxu0 %v315
    %317 = vmatprep.subr.mxu0 0.0
    %v318 = vand.u32 %v28, 4294901760
    %v319 = vsub.f32 %v28, %v318
    %320 = vmatpush1.msra.mxu0 %v319
    %321 = vmatprep.subr.mxu0 0.0
    %v322 = vand.u32 %v29, 4294901760
    %v323 = vsub.f32 %v29, %v322
    %324 = vmatpush1.msra.mxu0 %v323
    %325 = vmatprep.subr.mxu0 0.0
    %v326 = vand.u32 %v30, 4294901760
    %v327 = vsub.f32 %v30, %v326
    %328 = vmatpush1.msra.mxu0 %v327
    %329 = vmatprep.subr.mxu0 0.0
    %v330 = vand.u32 %v31, 4294901760
    %v331 = vsub.f32 %v31, %v330
    %332 = vmatpush1.msra.mxu0 %v331
    %333 = vmatprep.subr.mxu0 0.0
    %v334 = vand.u32 %v32, 4294901760
    %v335 = vsub.f32 %v32, %v334
    %336 = vmatpush1.msra.mxu0 %v335
    %337 = vmatprep.subr.mxu0 0.0
    %v338 = vand.u32 %v33, 4294901760
    %v339 = vsub.f32 %v33, %v338
    %340 = vmatpush1.msra.mxu0 %v339
    %341 = vmatprep.subr.mxu0 0.0
    %v342 = vand.u32 %v34, 4294901760
    %v343 = vsub.f32 %v34, %v342
    %344 = vmatpush1.msra.mxu0 %v343
    %345 = vmatprep.subr.mxu0 0.0
    %v346 = vand.u32 %v35, 4294901760
    %v347 = vsub.f32 %v35, %v346
    %348 = vmatpush1.msra.mxu0 %v347
    %349 = vmatprep.subr.mxu0 0.0
    %v350 = vand.u32 %v36, 4294901760
    %v351 = vsub.f32 %v36, %v350
    %352 = vmatpush1.msra.mxu0 %v351
    %353 = vmatprep.subr.mxu0 0.0
    %v354 = vand.u32 %v37, 4294901760
    %v355 = vsub.f32 %v37, %v354
    %356 = vmatpush1.msra.mxu0 %v355
    %357 = vmatprep.subr.mxu0 0.0
    %v358 = vand.u32 %v38, 4294901760
    %v359 = vsub.f32 %v38, %v358
    %360 = vmatpush1.msra.mxu0 %v359
    %361 = vmatprep.subr.mxu0 0.0
    %362 = vmatpush1.msra.mxu0 0.0
    %363 = vmatprep.subr.mxu0 0.0
    %364 = vmatpush1.msra.mxu0 0.0
    %365 = vmatprep.subr.mxu0 0.0
    %366 = vmatpush1.msra.mxu0 0.0
    %367 = vmatprep.subr.mxu0 0.0
    %368 = vmatpush1.msra.mxu0 0.0
    %369 = vmatprep.subr.mxu0 0.0
    %370 = vmatpush1.msra.mxu0 0.0
    %371 = vmatprep.subr.mxu0 0.0
    %372 = vmatpush1.msra.mxu0 0.0
    %373 = vmatprep.subr.mxu0 0.0
    %374 = vmatpush1.msra.mxu0 0.0
    %375 = vmatprep.subr.mxu0 0.0
    %376 = vmatpush1.msra.mxu0 0.0
    %377 = vmatprep.subr.mxu0 0.0
    %378 = vmatpush1.msra.mxu0 0.0
    %379 = vmatprep.subr.mxu0 0.0
    %380 = vmatpush1.msra.mxu0 0.0
    %381 = vmatprep.subr.mxu0 0.0
    %382 = vmatpush1.msra.mxu0 0.0
    %383 = vmatprep.subr.mxu0 0.0
    %384 = vmatpush1.msra.mxu0 0.0
    %385 = vmatprep.subr.mxu0 0.0
    %386 = vmatpush1.msra.mxu0 0.0
    %387 = vmatprep.subr.mxu0 0.0
    %388 = vmatpush1.msra.mxu0 0.0
    %389 = vmatprep.subr.mxu0 0.0
    %390 = vmatpush1.msra.mxu0 0.0
    %391 = vmatprep.subr.mxu0 0.0
    %392 = vmatpush1.msra.mxu0 0.0
    %393 = vmatprep.mubr.f32.mxu0 0.0
    %v394 = vand.u32 %v21, 4294901760
    %v395 = vsub.f32 %v21, %v394
    %396 = vmatmul.mubr.f32.gmra.mrb[0].mxu0 %v395
    %v397 = vpop.f32.mrb[0].mxu0
    %v398 = vadd.f32 %v288, %v397
    %v399 = vpop.f32.mrb[0].mxu0
    %400 = vmatprep.mubr.f32.mxu0 0.0
    %v401 = vand.u32 %v22, 4294901760
    %v402 = vsub.f32 %v22, %v401
    %403 = vmatmul.mubr.f32.gmra.mrb[0].mxu0 %v402
    %v404 = vpop.f32.mrb[0].mxu0
    %v405 = vadd.f32 %v294, %v404
    %v406 = vpop.f32.mrb[0].mxu0
    %407 = vdwg.mxu0
    %408 = vmatprep.subr.mxu0 0.0
    %v409 = vand.u32 %v23, 4294901760
    %410 = vmatpush1.msra.mxu0 %v409
    %411 = vmatprep.subr.mxu0 0.0
    %v412 = vand.u32 %v24, 4294901760
    %413 = vmatpush1.msra.mxu0 %v412
    %414 = vmatprep.subr.mxu0 0.0
    %v415 = vand.u32 %v25, 4294901760
    %416 = vmatpush1.msra.mxu0 %v415
    %417 = vmatprep.subr.mxu0 0.0
    %v418 = vand.u32 %v26, 4294901760
    %419 = vmatpush1.msra.mxu0 %v418
    %420 = vmatprep.subr.mxu0 0.0
    %v421 = vand.u32 %v27, 4294901760
    %422 = vmatpush1.msra.mxu0 %v421
    %423 = vmatprep.subr.mxu0 0.0
    %v424 = vand.u32 %v28, 4294901760
    %425 = vmatpush1.msra.mxu0 %v424
    %426 = vmatprep.subr.mxu0 0.0
    %v427 = vand.u32 %v29, 4294901760
    %428 = vmatpush1.msra.mxu0 %v427
    %429 = vmatprep.subr.mxu0 0.0
    %v430 = vand.u32 %v30, 4294901760
    %431 = vmatpush1.msra.mxu0 %v430
    %432 = vmatprep.subr.mxu0 0.0
    %v433 = vand.u32 %v31, 4294901760
    %434 = vmatpush1.msra.mxu0 %v433
    %435 = vmatprep.subr.mxu0 0.0
    %v436 = vand.u32 %v32, 4294901760
    %437 = vmatpush1.msra.mxu0 %v436
    %438 = vmatprep.subr.mxu0 0.0
    %v439 = vand.u32 %v33, 4294901760
    %440 = vmatpush1.msra.mxu0 %v439
    %441 = vmatprep.subr.mxu0 0.0
    %v442 = vand.u32 %v34, 4294901760
    %443 = vmatpush1.msra.mxu0 %v442
    %444 = vmatprep.subr.mxu0 0.0
    %v445 = vand.u32 %v35, 4294901760
    %446 = vmatpush1.msra.mxu0 %v445
    %447 = vmatprep.subr.mxu0 0.0
    %v448 = vand.u32 %v36, 4294901760
    %449 = vmatpush1.msra.mxu0 %v448
    %450 = vmatprep.subr.mxu0 0.0
    %v451 = vand.u32 %v37, 4294901760
    %452 = vmatpush1.msra.mxu0 %v451
    %453 = vmatprep.subr.mxu0 0.0
    %v454 = vand.u32 %v38, 4294901760
    %455 = vmatpush1.msra.mxu0 %v454
    %456 = vmatprep.subr.mxu0 0.0
    %457 = vmatpush1.msra.mxu0 0.0
    %458 = vmatprep.subr.mxu0 0.0
    %459 = vmatpush1.msra.mxu0 0.0
    %460 = vmatprep.subr.mxu0 0.0
    %461 = vmatpush1.msra.mxu0 0.0
    %462 = vmatprep.subr.mxu0 0.0
    %463 = vmatpush1.msra.mxu0 0.0
    %464 = vmatprep.subr.mxu0 0.0
    %465 = vmatpush1.msra.mxu0 0.0
    %466 = vmatprep.subr.mxu0 0.0
    %467 = vmatpush1.msra.mxu0 0.0
    %468 = vmatprep.subr.mxu0 0.0
    %469 = vmatpush1.msra.mxu0 0.0
    %470 = vmatprep.subr.mxu0 0.0
    %471 = vmatpush1.msra.mxu0 0.0
    %472 = vmatprep.subr.mxu0 0.0
    %473 = vmatpush1.msra.mxu0 0.0
    %474 = vmatprep.subr.mxu0 0.0
    %475 = vmatpush1.msra.mxu0 0.0
    %476 = vmatprep.subr.mxu0 0.0
    %477 = vmatpush1.msra.mxu0 0.0
    %478 = vmatprep.subr.mxu0 0.0
    %479 = vmatpush1.msra.mxu0 0.0
    %480 = vmatprep.subr.mxu0 0.0
    %481 = vmatpush1.msra.mxu0 0.0
    %482 = vmatprep.subr.mxu0 0.0
    %483 = vmatpush1.msra.mxu0 0.0
    %484 = vmatprep.subr.mxu0 0.0
    %485 = vmatpush1.msra.mxu0 0.0
    %486 = vmatprep.subr.mxu0 0.0
    %487 = vmatpush1.msra.mxu0 0.0
    %488 = vmatprep.mubr.f32.mxu0 0.0
    %v489 = vand.u32 %v21, 4294901760
    %v490 = vsub.f32 %v21, %v489
    %v491 = vand.u32 %v490, 4294901760
    %492 = vmatmul.mubr.f32.gmra.mrb[0].mxu0 %v491
    %v493 = vpop.f32.mrb[0].mxu0
    %v494 = vadd.f32 %v398, %v493
    %v495 = vpop.f32.mrb[0].mxu0
    %496 = vmatprep.mubr.f32.mxu0 0.0
    %v497 = vand.u32 %v22, 4294901760
    %v498 = vsub.f32 %v22, %v497
    %v499 = vand.u32 %v498, 4294901760
    %500 = vmatmul.mubr.f32.gmra.mrb[0].mxu0 %v499
    %v501 = vpop.f32.mrb[0].mxu0
    %v502 = vadd.f32 %v405, %v501
    %v503 = vpop.f32.mrb[0].mxu0
    %504 = vdwg.mxu0
    %505 = vmatprep.subr.mxu0 0.0
    %v506 = vand.u32 %v23, 4294901760
    %v507 = vsub.f32 %v23, %v506
    %v508 = vand.u32 %v507, 4294901760
    %509 = vmatpush1.msra.mxu0 %v508
    %510 = vmatprep.subr.mxu0 0.0
    %v511 = vand.u32 %v24, 4294901760
    %v512 = vsub.f32 %v24, %v511
    %v513 = vand.u32 %v512, 4294901760
    %514 = vmatpush1.msra.mxu0 %v513
    %515 = vmatprep.subr.mxu0 0.0
    %v516 = vand.u32 %v25, 4294901760
    %v517 = vsub.f32 %v25, %v516
    %v518 = vand.u32 %v517, 4294901760
    %519 = vmatpush1.msra.mxu0 %v518
    %520 = vmatprep.subr.mxu0 0.0
    %v521 = vand.u32 %v26, 4294901760
    %v522 = vsub.f32 %v26, %v521
    %v523 = vand.u32 %v522, 4294901760
    %524 = vmatpush1.msra.mxu0 %v523
    %525 = vmatprep.subr.mxu0 0.0
    %v526 = vand.u32 %v27, 4294901760
    %v527 = vsub.f32 %v27, %v526
    %v528 = vand.u32 %v527, 4294901760
    %529 = vmatpush1.msra.mxu0 %v528
    %530 = vmatprep.subr.mxu0 0.0
    %v531 = vand.u32 %v28, 4294901760
    %v532 = vsub.f32 %v28, %v531
    %v533 = vand.u32 %v532, 4294901760
    %534 = vmatpush1.msra.mxu0 %v533
    %535 = vmatprep.subr.mxu0 0.0
    %v536 = vand.u32 %v29, 4294901760
    %v537 = vsub.f32 %v29, %v536
    %v538 = vand.u32 %v537, 4294901760
    %539 = vmatpush1.msra.mxu0 %v538
    %540 = vmatprep.subr.mxu0 0.0
    %v541 = vand.u32 %v30, 4294901760
    %v542 = vsub.f32 %v30, %v541
    %v543 = vand.u32 %v542, 4294901760
    %544 = vmatpush1.msra.mxu0 %v543
    %545 = vmatprep.subr.mxu0 0.0
    %v546 = vand.u32 %v31, 4294901760
    %v547 = vsub.f32 %v31, %v546
    %v548 = vand.u32 %v547, 4294901760
    %549 = vmatpush1.msra.mxu0 %v548
    %550 = vmatprep.subr.mxu0 0.0
    %v551 = vand.u32 %v32, 4294901760
    %v552 = vsub.f32 %v32, %v551
    %v553 = vand.u32 %v552, 4294901760
    %554 = vmatpush1.msra.mxu0 %v553
    %555 = vmatprep.subr.mxu0 0.0
    %v556 = vand.u32 %v33, 4294901760
    %v557 = vsub.f32 %v33, %v556
    %v558 = vand.u32 %v557, 4294901760
    %559 = vmatpush1.msra.mxu0 %v558
    %560 = vmatprep.subr.mxu0 0.0
    %v561 = vand.u32 %v34, 4294901760
    %v562 = vsub.f32 %v34, %v561
    %v563 = vand.u32 %v562, 4294901760
    %564 = vmatpush1.msra.mxu0 %v563
    %565 = vmatprep.subr.mxu0 0.0
    %v566 = vand.u32 %v35, 4294901760
    %v567 = vsub.f32 %v35, %v566
    %v568 = vand.u32 %v567, 4294901760
    %569 = vmatpush1.msra.mxu0 %v568
    %570 = vmatprep.subr.mxu0 0.0
    %v571 = vand.u32 %v36, 4294901760
    %v572 = vsub.f32 %v36, %v571
    %v573 = vand.u32 %v572, 4294901760
    %574 = vmatpush1.msra.mxu0 %v573
    %575 = vmatprep.subr.mxu0 0.0
    %v576 = vand.u32 %v37, 4294901760
    %v577 = vsub.f32 %v37, %v576
    %v578 = vand.u32 %v577, 4294901760
    %579 = vmatpush1.msra.mxu0 %v578
    %580 = vmatprep.subr.mxu0 0.0
    %v581 = vand.u32 %v38, 4294901760
    %v582 = vsub.f32 %v38, %v581
    %v583 = vand.u32 %v582, 4294901760
    %584 = vmatpush1.msra.mxu0 %v583
    %585 = vmatprep.subr.mxu0 0.0
    %586 = vmatpush1.msra.mxu0 0.0
    %587 = vmatprep.subr.mxu0 0.0
    %588 = vmatpush1.msra.mxu0 0.0
    %589 = vmatprep.subr.mxu0 0.0
    %590 = vmatpush1.msra.mxu0 0.0
    %591 = vmatprep.subr.mxu0 0.0
    %592 = vmatpush1.msra.mxu0 0.0
    %593 = vmatprep.subr.mxu0 0.0
    %594 = vmatpush1.msra.mxu0 0.0
    %595 = vmatprep.subr.mxu0 0.0
    %596 = vmatpush1.msra.mxu0 0.0
    %597 = vmatprep.subr.mxu0 0.0
    %598 = vmatpush1.msra.mxu0 0.0
    %599 = vmatprep.subr.mxu0 0.0
    %600 = vmatpush1.msra.mxu0 0.0
    %601 = vmatprep.subr.mxu0 0.0
    %602 = vmatpush1.msra.mxu0 0.0
    %603 = vmatprep.subr.mxu0 0.0
    %604 = vmatpush1.msra.mxu0 0.0
    %605 = vmatprep.subr.mxu0 0.0
    %606 = vmatpush1.msra.mxu0 0.0
    %607 = vmatprep.subr.mxu0 0.0
    %608 = vmatpush1.msra.mxu0 0.0
    %609 = vmatprep.subr.mxu0 0.0
    %610 = vmatpush1.msra.mxu0 0.0
    %611 = vmatprep.subr.mxu0 0.0
    %612 = vmatpush1.msra.mxu0 0.0
    %613 = vmatprep.subr.mxu0 0.0
    %614 = vmatpush1.msra.mxu0 0.0
    %615 = vmatprep.subr.mxu0 0.0
    %616 = vmatpush1.msra.mxu0 0.0
    %617 = vmatprep.mubr.f32.mxu0 0.0
    %v618 = vand.u32 %v21, 4294901760
    %619 = vmatmul.mubr.f32.gmra.mrb[0].mxu0 %v618
    %v620 = vpop.f32.mrb[0].mxu0
    %v621 = vadd.f32 %v494, %v620
    %v622 = vpop.f32.mrb[0].mxu0
    %623 = vmatprep.mubr.f32.mxu0 0.0
    %v624 = vand.u32 %v22, 4294901760
    %625 = vmatmul.mubr.f32.gmra.mrb[0].mxu0 %v624
    %v626 = vpop.f32.mrb[0].mxu0
    %v627 = vadd.f32 %v502, %v626
    %v628 = vpop.f32.mrb[0].mxu0
    %629 = vdwg.mxu0
    %630 = vmatprep.subr.mxu0 0.0
    %v631 = vand.u32 %v23, 4294901760
    %632 = vmatpush1.msra.mxu0 %v631
    %633 = vmatprep.subr.mxu0 0.0
    %v634 = vand.u32 %v24, 4294901760
    %635 = vmatpush1.msra.mxu0 %v634
    %636 = vmatprep.subr.mxu0 0.0
    %v637 = vand.u32 %v25, 4294901760
    %638 = vmatpush1.msra.mxu0 %v637
    %639 = vmatprep.subr.mxu0 0.0
    %v640 = vand.u32 %v26, 4294901760
    %641 = vmatpush1.msra.mxu0 %v640
    %642 = vmatprep.subr.mxu0 0.0
    %v643 = vand.u32 %v27, 4294901760
    %644 = vmatpush1.msra.mxu0 %v643
    %645 = vmatprep.subr.mxu0 0.0
    %v646 = vand.u32 %v28, 4294901760
    %647 = vmatpush1.msra.mxu0 %v646
    %648 = vmatprep.subr.mxu0 0.0
    %v649 = vand.u32 %v29, 4294901760
    %650 = vmatpush1.msra.mxu0 %v649
    %651 = vmatprep.subr.mxu0 0.0
    %v652 = vand.u32 %v30, 4294901760
    %653 = vmatpush1.msra.mxu0 %v652
    %654 = vmatprep.subr.mxu0 0.0
    %v655 = vand.u32 %v31, 4294901760
    %656 = vmatpush1.msra.mxu0 %v655
    %657 = vmatprep.subr.mxu0 0.0
    %v658 = vand.u32 %v32, 4294901760
    %659 = vmatpush1.msra.mxu0 %v658
    %660 = vmatprep.subr.mxu0 0.0
    %v661 = vand.u32 %v33, 4294901760
    %662 = vmatpush1.msra.mxu0 %v661
    %663 = vmatprep.subr.mxu0 0.0
    %v664 = vand.u32 %v34, 4294901760
    %665 = vmatpush1.msra.mxu0 %v664
    %666 = vmatprep.subr.mxu0 0.0
    %v667 = vand.u32 %v35, 4294901760
    %668 = vmatpush1.msra.mxu0 %v667
    %669 = vmatprep.subr.mxu0 0.0
    %v670 = vand.u32 %v36, 4294901760
    %671 = vmatpush1.msra.mxu0 %v670
    %672 = vmatprep.subr.mxu0 0.0
    %v673 = vand.u32 %v37, 4294901760
    %674 = vmatpush1.msra.mxu0 %v673
    %675 = vmatprep.subr.mxu0 0.0
    %v676 = vand.u32 %v38, 4294901760
    %677 = vmatpush1.msra.mxu0 %v676
    %678 = vmatprep.subr.mxu0 0.0
    %679 = vmatpush1.msra.mxu0 0.0
    %680 = vmatprep.subr.mxu0 0.0
    %681 = vmatpush1.msra.mxu0 0.0
    %682 = vmatprep.subr.mxu0 0.0
    %683 = vmatpush1.msra.mxu0 0.0
    %684 = vmatprep.subr.mxu0 0.0
    %685 = vmatpush1.msra.mxu0 0.0
    %686 = vmatprep.subr.mxu0 0.0
    %687 = vmatpush1.msra.mxu0 0.0
    %688 = vmatprep.subr.mxu0 0.0
    %689 = vmatpush1.msra.mxu0 0.0
    %690 = vmatprep.subr.mxu0 0.0
    %691 = vmatpush1.msra.mxu0 0.0
    %692 = vmatprep.subr.mxu0 0.0
    %693 = vmatpush1.msra.mxu0 0.0
    %694 = vmatprep.subr.mxu0 0.0
    %695 = vmatpush1.msra.mxu0 0.0
    %696 = vmatprep.subr.mxu0 0.0
    %697 = vmatpush1.msra.mxu0 0.0
    %698 = vmatprep.subr.mxu0 0.0
    %699 = vmatpush1.msra.mxu0 0.0
    %700 = vmatprep.subr.mxu0 0.0
    %701 = vmatpush1.msra.mxu0 0.0
    %702 = vmatprep.subr.mxu0 0.0
    %703 = vmatpush1.msra.mxu0 0.0
    %704 = vmatprep.subr.mxu0 0.0
    %705 = vmatpush1.msra.mxu0 0.0
    %706 = vmatprep.subr.mxu0 0.0
    %707 = vmatpush1.msra.mxu0 0.0
    %708 = vmatprep.subr.mxu0 0.0
    %709 = vmatpush1.msra.mxu0 0.0
    %710 = vmatprep.mubr.f32.mxu0 0.0
    %v711 = vand.u32 %v21, 4294901760
    %712 = vmatmul.mubr.f32.gmra.mrb[0].mxu0 %v711
    %v713 = vpop.f32.mrb[0].mxu0
    %v714 = vadd.f32 %v621, %v713
    %v715 = vpop.f32.mrb[0].mxu0
    %716 = vmatprep.mubr.f32.mxu0 0.0
    %v717 = vand.u32 %v22, 4294901760
    %718 = vmatmul.mubr.f32.gmra.mrb[0].mxu0 %v717
    %v719 = vpop.f32.mrb[0].mxu0
    %v720 = vadd.f32 %v627, %v719
    %v721 = vpop.f32.mrb[0].mxu0
    %722 = vdwg.mxu0
    %v723 = vmax.f32 %v714, 0.0
    %v724 = vmax.f32 %v720, 0.0
    %v725 = vrsqrt.pop %v723
    %v726 = vmul.f32 %v723, %v725
    %vm727 = vcmp.eq.f32.partialorder %v723, inf
    %v728 = vsel %vm727, %v723, %v726
    %vm729 = vcmp.eq.f32.partialorder %v723, 0.0
    %v730 = vand.u32 %v723, 2147483648
    %v731 = vsel %vm729, %v730, %v728
    %v732 = vrsqrt.pop %v724
    %v733 = vmul.f32 %v724, %v732
    %vm734 = vcmp.eq.f32.partialorder %v724, inf
    %v735 = vsel %vm734, %v724, %v733
    %vm736 = vcmp.eq.f32.partialorder %v724, 0.0
    %v737 = vand.u32 %v724, 2147483648
    %v738 = vsel %vm736, %v737, %v735
    %vm739 = vcmask 64512
    %v740 = vsel %vm739, %v731, 0.0
    %v741 = vsel %vm739, %v738, 0.0
    %v742 = vadd.f32 %v740, %v741
    %v743 = vrot.slane %v742, 4
    %v744 = vadd.f32 %v742, %v743
    %v745 = vrot.slane %v744, 2
    %v746 = vadd.f32 %v744, %v745
    %v747 = vrot.slane %v746, 1
    %v748 = vadd.f32 %v746, %v747
    %v749 = vlaneseq
    %v750 = vshrl.u32 %v749, 7
    %vm751 = vcmp.eq.s32.totalorder %v750, 0
    %v752 = vsel %vm751, %v748, 0.0
    %753 = vst.msk [vmem:[#allocation2] sm:$0xff] %vm739, %v752
    // Predicated region
    $region14: #{tpu_custom_call.1} parent=1 // pred_check
      _
    $region15: #{tpu_custom_call.1} parent=1 // pred_check_branch
      %755 = sbr.rel (0) target = $region17
    $region16: #{tpu_custom_call.1} parent=1 // pred_region
      %s757 = ssub.s32 128, 128
      %758 = vsyncadd [#allocation3], %s757
      %s760 = sshll.u32 [#allocation2], 4
      %s761 = int_to_ptr.vmem [resolvable:$true] %s760
      %763 = dma.vmem_to_hbm [thread:$0]  %s761, 128, %s3, [#allocation3]
    $region17: #{tpu_custom_call.1} parent=1 // pred_fallthru
      _
    // Predicated region
    $region18: #{tpu_custom_call.1} parent=1 // pred_check
      _
    $region19: #{tpu_custom_call.1} parent=1 // pred_check_branch
      %765 = sbr.rel (0) target = $region21
    $region20: #{tpu_custom_call.1} parent=1 // pred_region
      %766 = dma.done [#allocation3], 128
    $region21: #{tpu_custom_call.1} parent=1 // pred_fallthru
      _
    %767 = vsyncpa [#allocation3], 1

</llo_original>
